<compile_context>
chip_gen: v6e
topology: v6e:2x2x1
jax: 0.10.0
libtpu: 0.0.40
codegen_flags: <defaults>
</compile_context>

<pallas_src>
import math

import jax
import jax.numpy as jnp
from jax.experimental import pallas as pl
from jax.experimental.pallas import tpu as pltpu


def _build_pe(d_model: int, max_len: int = 5000) -> jnp.ndarray:
    """Sinusoidal positional-encoding table, matching the PyTorch __init__
    exactly (float32, shape (max_len, d_model))."""
    position = jnp.arange(0, max_len, dtype=jnp.float32)[:, None]            # (L, 1)
    div_term = jnp.exp(
        jnp.arange(0, d_model, 2, dtype=jnp.float32) * (-math.log(10000.0) / d_model)
    )                                                                         # (ceil(D/2),)
    args = position * div_term                                                # (L, ceil(D/2))
    pe = jnp.zeros((max_len, d_model), dtype=jnp.float32)
    pe = pe.at[:, 0::2].set(jnp.sin(args))
    pe = pe.at[:, 1::2].set(jnp.cos(args)[:, : d_model // 2])
    return pe


def _add_pe_kernel(x_ref, pe_ref, o_ref):
    # x_ref: (B, tC); pe_ref: (1, tC) -> sublane broadcast over the batch dim.
    o_ref[...] = (x_ref[...] + pe_ref[...]).astype(o_ref.dtype)


def _round_up(v: int, m: int) -> int:
    return -(-v // m) * m


def _vmem_capacity_bytes() -> int:
    """Physical VMEM of the attached chip; conservative (v7x-sized) fallback."""
    try:
        cap = getattr(pltpu.get_tpu_info(), "vmem_capacity_bytes", None)
        if cap:
            return int(cap)
    except Exception:
        pass
    return 64 << 20


def _choose_col_tile(n_rows: int, n_cols: int, dtype, vmem_bytes: int) -> int:
    """Lane-dense column tile with sublane-padding-aware VMEM accounting.

    All three streams are double-buffered and every block is physically padded
    to the sublane multiple: x/out blocks occupy (pad(B), tC) in VMEM and the
    (1, tC) pe block occupies (sub, tC).  Total footprint:
        2 * (2*pad(B) + sub) * tC * itemsize  <=  ~40% of physical VMEM.
    """
    itemsize = jnp.dtype(dtype).itemsize
    sub = max(8, 32 // itemsize)              # sublane multiple: 8 f32 / 16 bf16 / 32 i8
    pad_rows = _round_up(n_rows, sub)
    bytes_per_col = 2 * (2 * pad_rows + sub) * itemsize
    budget = int(0.40 * vmem_bytes)
    tc = max(128, (budget // bytes_per_col) // 128 * 128)
    # Past ~2-4 MiB per (padded) x block there is only a few % left vs the HBM
    # roofline; stay ~2 MiB on v7x (64 MiB VMEM), allow ~4 MiB on v5e/v6e.
    block_target = (4 << 20) if vmem_bytes >= (100 << 20) else (2 << 20)
    tc = min(tc, max(128, (block_target // (pad_rows * itemsize)) // 128 * 128))
    if n_cols <= tc:
        return n_cols                         # single full-extent block (always legal)
    if n_cols >= 128:
        tc = min(tc, (n_cols // 128) * 128)
    return max(tc, 128)


class PositionalEncoding:
    """Pallas-TPU equivalent of the PyTorch module: __call__(x) = x + pe[:, :S, :]."""

    def __init__(self, d_model: int, max_len: int = 5000, dtype=jnp.float32):
        self.d_model = d_model
        self.max_len = max_len
        self.dtype = jnp.dtype(dtype)
        pe = _build_pe(d_model, max_len)                       # f32 (max_len, D)
        # Hoisted out of the per-call path: cast once, keep a flat row-major
        # view so  pe_flat[:, :S*D] == pe[:S].reshape(1, S*D).
        # (When dtype == float32 this matches PyTorch's f32 add bit-for-bit.)
        self.pe_flat = pe.astype(self.dtype).reshape(1, max_len * d_model)

    def __call__(self, x: jnp.ndarray, *, in_place: bool = False) -> jnp.ndarray:
        B, S, D = x.shape
        assert D == self.d_model, f"d_model mismatch: x has {D}, pe has {self.d_model}"
        assert S <= self.max_len, f"seq_len {S} exceeds positional-encoding max_len {self.max_len}"

        F = S * D
        x_flat = x.reshape(B, F)
        pe_flat = self.pe_flat[:, :F]
        if pe_flat.dtype != x.dtype:           # fallback if caller changes dtypes
            pe_flat = pe_flat.astype(x.dtype)

        itemsize = jnp.dtype(x.dtype).itemsize
        vmem_bytes = _vmem_capacity_bytes()
        tC = _choose_col_tile(B, F, x.dtype, vmem_bytes)
        num_tiles = pl.cdiv(F, tC)
        if num_tiles > 1 and F >= 4 * 128:
            # v7x megacore balance: even tile count, >= 4; only ever *shrinks*
            # the tile, so the VMEM budget above is preserved.
            want = max(4, num_tiles + (num_tiles % 2))
            tC = min(tC, max(128, _round_up(pl.cdiv(F, want), 128)))
            num_tiles = pl.cdiv(F, tC)

        # Memory-bound elementwise add: bytes = read x + read pe + write out.
        bytes_accessed = (2 * B * F + F) * itemsize
        alias_kwargs = {"input_output_aliases": {0: 0}} if in_place else {}

        out_flat = pl.pallas_call(
            _add_pe_kernel,
            out_shape=jax.ShapeDtypeStruct((B, F), x.dtype),
            grid_spec=pltpu.PrefetchScalarGridSpec(
                num_scalar_prefetch=0,
                grid=(num_tiles,),
                in_specs=[
                    pl.BlockSpec((B, tC), lambda c: (0, c)),   # activations
                    pl.BlockSpec((1, tC), lambda c: (0, c)),   # pe tile (once per step)
                ],
                out_specs=pl.BlockSpec((B, tC), lambda c: (0, c)),
            ),
            compiler_params=pltpu.CompilerParams(
                dimension_semantics=("parallel",),
                # Generation-aware scoped-VMEM limit: ~48 MiB on v7x (64 MiB
                # physical), 64 MiB on v5e/v6e (128 MiB physical; v5e's default
                # scoped limit is only 16 MiB).
                vmem_limit_bytes=int(min(3 * vmem_bytes // 4, 64 << 20)),
            ),
            cost_estimate=pl.CostEstimate(
                flops=B * F, transcendentals=0, bytes_accessed=bytes_accessed),
            **alias_kwargs,
        )(x_flat, pe_flat)

        return out_flat.reshape(B, S, D)


if __name__ == "__main__":
    # Small shapes consistent with the module: batch=2, seq=8, d_model=32.
    B, S, D = 2, 8, 32
    MAX_LEN = 64  # keep the table small for the demo (module default is 5000)

    key = jax.random.PRNGKey(0)
    x = jax.random.normal(key, (B, S, D), dtype=jnp.float32)

    module = PositionalEncoding(D, MAX_LEN, dtype=x.dtype)
    out = module(x)
    out = jax.block_until_ready(out)

    # Reference check in plain JAX (f32 pe, matching the PyTorch buffer).
    ref = x + _build_pe(D, MAX_LEN)[None, :S, :]
    assert out.shape == (B, S, D)
    assert jnp.allclose(out, ref, atol=1e-6), "mismatch vs reference"

    print("KERNEL_OK")
</pallas_src>

<mosaic_0001>
module attributes {stable_mosaic.version = 11 : i64} {
  func.func @_add_pe_kernel(%arg0: i32, %arg1: memref<2x256xf32, #tpu.memory_space<vmem>>, %arg2: memref<1x256xf32, #tpu.memory_space<vmem>>, %arg3: memref<2x256xf32, #tpu.memory_space<vmem>>) attributes {dimension_semantics = [#tpu.dimension_semantics<parallel>], iteration_bounds = array<i64: 1>, scalar_prefetch = 0 : i64, scratch_operands = 0 : i64, tpu.core_type = #tpu.core_type<tc>, window_params = [{transform_indices = @transform_0, window_bounds = array<i64: 2, 256>}, {transform_indices = @transform_1, window_bounds = array<i64: 1, 256>}, {transform_indices = @transform_2, window_bounds = array<i64: 2, 256>}]} {
    %c0 = arith.constant 0 : index
    %c0_0 = arith.constant 0 : index
    %0 = vector.load %arg1[%c0, %c0_0] : memref<2x256xf32, #tpu.memory_space<vmem>>, vector<2x256xf32>
    %c0_1 = arith.constant 0 : index
    %c0_2 = arith.constant 0 : index
    %1 = vector.load %arg2[%c0_1, %c0_2] : memref<1x256xf32, #tpu.memory_space<vmem>>, vector<1x256xf32>
    %2 = vector.broadcast %1 : vector<1x256xf32> to vector<2x256xf32>
    %3 = arith.addf %0, %2 : vector<2x256xf32>
    %c0_3 = arith.constant 0 : index
    %c0_4 = arith.constant 0 : index
    %4 = vector.load %arg3[%c0_3, %c0_4] : memref<2x256xf32, #tpu.memory_space<vmem>>, vector<2x256xf32>
    tpu.vector_store %arg3[%c0_3, %c0_4], %3 {strides = array<i32>} : memref<2x256xf32, #tpu.memory_space<vmem>>, vector<2x256xf32>,
    return
  }
  func.func @transform_0(%arg0: i32) -> (i32, i32) {
    %c0_i32 = arith.constant 0 : i32
    %c0_i32_0 = arith.constant 0 : i32
    return %c0_i32, %arg0 : i32, i32
  }
  func.func @transform_1(%arg0: i32) -> (i32, i32) {
    %c0_i32 = arith.constant 0 : i32
    %c0_i32_0 = arith.constant 0 : i32
    return %c0_i32, %arg0 : i32, i32
  }
  func.func @transform_2(%arg0: i32) -> (i32, i32) {
    %c0_i32 = arith.constant 0 : i32
    %c0_i32_0 = arith.constant 0 : i32
    return %c0_i32, %arg0 : i32, i32
  }
}

</mosaic_0001>

<llo_original>
// kernel: tpu_custom_call.1
$region0: #{tpu_custom_call.1}
  #allocation0 [shape = 'u32[]', space=smem, size = 0x4, offset = 0x4, fixed_abs, tag = 'smem constant byte address 0x4 - core index']
  #allocation1 [shape = 'u32[144,128]{1,0:T(1,128)}', space=vmem, size = 0x12000, scoped, tag = 'internal scratch']
  %s0 = inlined_call_operand.hbm [shape: f32[2,256], index: 0, kind: input, shape index: {}]
  %s1 = inlined_call_operand.hbm [shape: f32[1,256], index: 1, kind: input, shape index: {}]
  %s2 = inlined_call_operand.hbm [shape: f32[2,256], index: 2, kind: output, shape index: {}]
  %s3 = sld [smem:[#allocation0]]
  $region26: #{tpu_custom_call.1} parent=0
    _
  %s5 = ssub.s32 1, %s3
  %s6 = scalar_select 0, %s5, %s3
  $region1: #{tpu_custom_call.1} parent=0
    #allocation2 [shape = 'u8[2048]{0}', space=vmem, size = 0x800, scoped, tag = 'input window, operand 0, single buffered']
    #allocation3 [shape = 's32[1]{0}', space=sflag, size = 0x4, scoped, tag = 'scoped memory for tpu_custom_call.1']
    #allocation4 [shape = 's32[1]{0}', space=sflag, size = 0x4, scoped, tag = 'scoped memory for tpu_custom_call.1']
    #allocation5 [shape = 'u8[1024]{0}', space=vmem, size = 0x400, scoped, tag = 'input window, operand 1, single buffered']
    #allocation6 [shape = 's32[1]{0}', space=sflag, size = 0x4, scoped, tag = 'scoped memory for tpu_custom_call.1']
    #allocation7 [shape = 'u8[2048]{0}', space=vmem, size = 0x800, scoped, tag = 'output window, operand 0, single buffered']
    %7 = vsyncpa [#allocation3], 0
    %8 = vsyncpa [#allocation6], 0
    %9 = vsyncpa [#allocation4], 0
    // Predicated region
    $region2: #{tpu_custom_call.1} parent=1 // pred_check
      _
    $region3: #{tpu_custom_call.1} parent=1 // pred_check_branch
      %11 = sbr.rel (0) target = $region5
    $region4: #{tpu_custom_call.1} parent=1 // pred_region
      %s13 = ssub.s32 64, 64
      %14 = vsyncadd [#allocation3], %s13
      %s16 = sshll.u32 [#allocation2], 4
      %s17 = int_to_ptr.vmem [resolvable:$true] %s16
      %19 = dma.hbm_to_vmem [thread:$0]  %s0, 64, %s17, [#allocation3]
    $region5: #{tpu_custom_call.1} parent=1 // pred_fallthru
      _
    // Predicated region
    $region6: #{tpu_custom_call.1} parent=1 // pred_check
      _
    $region7: #{tpu_custom_call.1} parent=1 // pred_check_branch
      %21 = sbr.rel (0) target = $region9
    $region8: #{tpu_custom_call.1} parent=1 // pred_region
      %s23 = ssub.s32 32, 32
      %24 = vsyncadd [#allocation6], %s23
      %s26 = sshll.u32 [#allocation5], 4
      %s27 = int_to_ptr.vmem [resolvable:$true] %s26
      %29 = dma.hbm_to_vmem [thread:$0]  %s1, 32, %s27, [#allocation6]
    $region9: #{tpu_custom_call.1} parent=1 // pred_fallthru
      _
    // Predicated region
    $region10: #{tpu_custom_call.1} parent=1 // pred_check
      _
    $region11: #{tpu_custom_call.1} parent=1 // pred_check_branch
      %31 = sbr.rel (0) target = $region13
    $region12: #{tpu_custom_call.1} parent=1 // pred_region
      %32 = dma.done [#allocation3], 64
    $region13: #{tpu_custom_call.1} parent=1 // pred_fallthru
      _
    // Predicated region
    $region14: #{tpu_custom_call.1} parent=1 // pred_check
      _
    $region15: #{tpu_custom_call.1} parent=1 // pred_check_branch
      %34 = sbr.rel (0) target = $region17
    $region16: #{tpu_custom_call.1} parent=1 // pred_region
      %35 = dma.done [#allocation6], 32
    $region17: #{tpu_custom_call.1} parent=1 // pred_fallthru
      _
    %v36 = vld [vmem:[#allocation2] sm:$0xf]
    %v37 = vld [vmem:[#allocation5] sm:$0x3]
    %v39 = vlaneseq
    %v40 = vshrl.u32 %v39, 7
    %v41 = vsub.s32 0, %v40
    %v42 = vrot.slane %v37, %v41
    %v43 = vlaneseq
    %v44 = vshrl.u32 %v43, 7
    %v45 = vsub.s32 1, %v44
    %v46 = vrot.slane %v37, %v45
    %v47 = vcombine.low %v42, %v46
    %v49 = vunpack.c.l.s4 1983009808
    %v50 = vunpack.c.0.s8 %v49
    %v51 = vlaneseq
    %v52 = vshrl.u32 %v51, 7
    %v53 = vsub.s32 %v50, %v52
    %v54 = vrot.slane %v47, %v53
    %v56 = vadd.f32 %v36, %v54
    %57 = vst [vmem:[#allocation7] sm:$0xf] %v56
    // Predicated region
    $region18: #{tpu_custom_call.1} parent=1 // pred_check
      _
    $region19: #{tpu_custom_call.1} parent=1 // pred_check_branch
      %59 = sbr.rel (0) target = $region21
    $region20: #{tpu_custom_call.1} parent=1 // pred_region
      %s61 = ssub.s32 64, 64
      %62 = vsyncadd [#allocation4], %s61
      %s64 = sshll.u32 [#allocation7], 4
      %s65 = int_to_ptr.vmem [resolvable:$true] %s64
      %67 = dma.vmem_to_hbm [thread:$0]  %s65, 64, %s2, [#allocation4]
    $region21: #{tpu_custom_call.1} parent=1 // pred_fallthru
      _
    // Predicated region
    $region22: #{tpu_custom_call.1} parent=1 // pred_check
      _
    $region23: #{tpu_custom_call.1} parent=1 // pred_check_branch
      %69 = sbr.rel (0) target = $region25
    $region24: #{tpu_custom_call.1} parent=1 // pred_region
      %70 = dma.done [#allocation4], 64
    $region25: #{tpu_custom_call.1} parent=1 // pred_fallthru
      _
    %71 = vsyncpa [#allocation3], 1
    %72 = vsyncpa [#allocation6], 1
    %73 = vsyncpa [#allocation4], 1

</llo_original>
